<compile_context>
chip_gen: v6e
topology: v6e:2x2x1
jax: 0.10.0
libtpu: 0.0.40
codegen_flags: <defaults>
</compile_context>

<pallas_src>
import functools
import math

import jax
import jax.numpy as jnp
from jax.experimental import pallas as pl
from jax.experimental.pallas import tpu as pltpu

BN_EPS = 1e-5
BN_SCALE = 1.0 / math.sqrt(1.0 + BN_EPS)   # eval-mode BN: mean=0, var=1, w=1, b=0
VMEM_LIMIT = 32 * 1024 * 1024


def _round_up(x, m):
    return (x + m - 1) // m * m


# ---------------------------------------------------------------------------
# Fused GEMM kernels: out = [relu]((A @ W) + bias [+ residual])
# ---------------------------------------------------------------------------
def _mm_kernel(a_ref, b_ref, c_ref, o_ref, *, relu):
    y = jnp.dot(a_ref[...], b_ref[...], preferred_element_type=jnp.float32)
    y = y + c_ref[...]
    if relu:
        y = jnp.maximum(y, 0.0)
    o_ref[...] = y.astype(o_ref.dtype)


def _mm_res_kernel(a_ref, b_ref, c_ref, r_ref, o_ref, *, relu):
    y = jnp.dot(a_ref[...], b_ref[...], preferred_element_type=jnp.float32)
    y = y + c_ref[...] + r_ref[...].astype(jnp.float32)
    if relu:
        y = jnp.maximum(y, 0.0)
    o_ref[...] = y.astype(o_ref.dtype)


def _pick_tm(M, cap=512):
    """M tile: the full M when small, else an exact divisor near `cap`."""
    if M <= cap:
        return M, M
    for cand in range(cap + 128, 255, -8):
        if M % cand == 0:
            return cand, M
    return cap, _round_up(M, cap)


def _pick_tn(Np, m_blocks):
    """Lane-dense N tile; keep >=2 j blocks when the i axis has only one."""
    if Np % 256 == 0 and (Np >= 512 or m_blocks >= 2):
        return 256
    return min(Np, 128)


@functools.partial(jax.jit, static_argnames=("n_out", "relu", "out_dtype"))
def matmul_bias(a, w_p, bias_p, residual=None, *, n_out, relu=False,
                out_dtype=jnp.float32):
    """[relu]((a @ w_p) + bias [+ residual]).

    w_p: (K, Np) bf16 with any BN scale pre-folded, Np = round_up(n_out, 128).
    bias_p: (1, Np) fp32.  Returns (M, n_out) in out_dtype.
    """
    M, K = a.shape
    Kw, Np = w_p.shape
    assert K == Kw, (K, Kw)
    a = a.astype(jnp.bfloat16)
    tm, Mp = _pick_tm(M)
    m_blocks = Mp // tm
    tn = _pick_tn(Np, m_blocks)
    if Mp != M:
        a = jnp.pad(a, ((0, Mp - M), (0, 0)))

    in_specs = [
        pl.BlockSpec((tm, K), lambda i, j: (i, 0)),
        pl.BlockSpec((K, tn), lambda i, j: (0, j)),
        pl.BlockSpec((1, tn), lambda i, j: (0, j)),
    ]
    args = [a, w_p, bias_p]
    if residual is not None:
        r = residual.astype(jnp.bfloat16)
        if r.shape != (Mp, Np):
            r = jnp.pad(r, ((0, Mp - r.shape[0]), (0, Np - r.shape[1])))
        in_specs.append(pl.BlockSpec((tm, tn), lambda i, j: (i, j)))
        args.append(r)
        kernel = functools.partial(_mm_res_kernel, relu=relu)
    else:
        kernel = functools.partial(_mm_kernel, relu=relu)

    out = pl.pallas_call(
        kernel,
        out_shape=jax.ShapeDtypeStruct((Mp, Np), out_dtype),
        grid_spec=pltpu.PrefetchScalarGridSpec(
            num_scalar_prefetch=0,
            grid=(m_blocks, Np // tn),
            in_specs=in_specs,
            out_specs=pl.BlockSpec((tm, tn), lambda i, j: (i, j)),
        ),
        compiler_params=pltpu.CompilerParams(
            dimension_semantics=("parallel", "parallel"),
            vmem_limit_bytes=VMEM_LIMIT),
    )(*args)
    if (Mp, Np) != (M, n_out):
        out = out[:M, :n_out]
    return out


# ---------------------------------------------------------------------------
# Depthwise 3x3x3 conv (groups == C), stride (1,2,2), pad (1,1,1)
# ---------------------------------------------------------------------------
def _dw_kernel(*refs, to_len):
    slabs = refs[:9]          # 9 spatial taps, each (N, 1, T+2, Wo*C) bf16
    w_ref = refs[9]           # (27, Wo*C) fp32
    o_ref = refs[10]          # (N, 1, To, Wo*C) fp32
    acc = jnp.zeros(o_ref.shape, jnp.float32)
    for a in range(3):        # temporal taps: shifted reads inside VMEM
        for s in range(9):
            k = a * 9 + s
            tap = slabs[s][:, :, a:a + to_len, :].astype(jnp.float32)
            acc = acc + tap * w_ref[k:k + 1, :]
    o_ref[...] = acc.astype(o_ref.dtype)


@jax.jit
def depthwise_conv3d_3x3x3(x, w_taps):
    """x: (N, C, T, H, W); w_taps: (27, C) ordered (kt, kh, kw)."""
    N, C, T, H, W = x.shape
    assert w_taps.shape == (27, C)
    To = T
    Ho = (H + 2 - 3) // 2 + 1
    Wo = (W + 2 - 3) // 2 + 1
    L = Wo * C
    xp = jnp.pad(x.transpose(0, 2, 3, 4, 1),
                 ((0, 0), (1, 1), (1, 1), (1, 1), (0, 0))).astype(jnp.bfloat16)
    slabs = []
    for i in range(3):
        for j in range(3):
            v = xp[:, :, i:i + 2 * Ho:2, j:j + 2 * Wo:2, :]      # (N,T+2,Ho,Wo,C)
            slabs.append(v.transpose(0, 2, 1, 3, 4).reshape(N, Ho, T + 2, L))
    w_tiled = jnp.tile(w_taps.astype(jnp.float32), (1, Wo))      # (27, Wo*C)

    in_specs = [pl.BlockSpec((N, 1, T + 2, L), lambda h: (0, h, 0, 0))
                for _ in range(9)]
    in_specs.append(pl.BlockSpec((27, L), lambda h: (0, 0)))
    out = pl.pallas_call(
        functools.partial(_dw_kernel, to_len=To),
        out_shape=jax.ShapeDtypeStruct((N, Ho, To, L), jnp.float32),
        grid_spec=pltpu.PrefetchScalarGridSpec(
            num_scalar_prefetch=0,
            grid=(Ho,),
            in_specs=in_specs,
            out_specs=pl.BlockSpec((N, 1, To, L), lambda h: (0, h, 0, 0)),
        ),
        compiler_params=pltpu.CompilerParams(
            dimension_semantics=("parallel",),
            vmem_limit_bytes=VMEM_LIMIT),
    )(*slabs, w_tiled)
    return out.reshape(N, Ho, To, Wo, C).transpose(0, 4, 2, 1, 3)  # NCDHW


# ---------------------------------------------------------------------------
# Small reductions (avg/max pooling, temporal mean) -- tiny, single block
# ---------------------------------------------------------------------------
def _reduce_kernel(x_ref, o_ref, *, op, r):
    acc = x_ref[:, 0, :]
    for t in range(1, r):
        if op == "mean":
            acc = acc + x_ref[:, t, :]
        else:
            acc = jnp.maximum(acc, x_ref[:, t, :])
    if op == "mean":
        acc = acc * (1.0 / r)
    o_ref[...] = acc


@functools.partial(jax.jit, static_argnames=("op",))
def reduce_axis1(x, *, op):
    """x: (M, R, C) -> (M, C); mean or max over axis 1 (R is tiny)."""
    M, R, C = x.shape
    return pl.pallas_call(
        functools.partial(_reduce_kernel, op=op, r=R),
        out_shape=jax.ShapeDtypeStruct((M, C), jnp.float32),
    )(x.astype(jnp.float32))


# ---------------------------------------------------------------------------
# Conv wrappers: bf16 im2col glue in JAX, fused GEMM in Pallas
# ---------------------------------------------------------------------------
@functools.partial(jax.jit, static_argnames=("n_out", "kshape", "stride", "pad",
                                             "relu", "out_dtype"))
def conv2d(x, w_p, b_p, residual=None, *, n_out, kshape, stride=1, pad=0,
           relu=False, out_dtype=jnp.bfloat16):
    N, C, H, W = x.shape
    _, Cw, kh, kw = kshape
    assert C == Cw
    xb = x.astype(jnp.bfloat16)
    xp = jnp.pad(xb, ((0, 0), (0, 0), (pad, pad), (pad, pad)))
    Ho = (H + 2 * pad - kh) // stride + 1
    Wo = (W + 2 * pad - kw) // stride + 1
    cols = [xp[:, :, i:i + stride * Ho:stride, j:j + stride * Wo:stride]
            for i in range(kh) for j in range(kw)]
    col = jnp.stack(cols, axis=2)                                  # (N,C,taps,Ho,Wo)
    col = col.transpose(0, 3, 4, 1, 2).reshape(N * Ho * Wo, C * kh * kw)
    res_flat = None
    if residual is not None:
        res_flat = residual.transpose(0, 2, 3, 1).reshape(N * Ho * Wo, n_out)
    y = matmul_bias(col, w_p, b_p, res_flat, n_out=n_out, relu=relu,
                    out_dtype=out_dtype)
    return y.reshape(N, Ho, Wo, n_out).transpose(0, 3, 1, 2)


@functools.partial(jax.jit, static_argnames=("n_out", "kshape", "stride", "pad",
                                             "relu", "out_dtype"))
def conv3d(x, w_p, b_p, *, n_out, kshape, stride, pad, relu=False,
           out_dtype=jnp.bfloat16):
    N, C, T, H, W = x.shape
    _, Cw, kt, kh, kw = kshape
    assert C == Cw
    st, sh, sw = stride
    pt, ph, pw = pad
    xb = x.astype(jnp.bfloat16)
    xp = jnp.pad(xb, ((0, 0), (0, 0), (pt, pt), (ph, ph), (pw, pw)))
    To = (T + 2 * pt - kt) // st + 1
    Ho = (H + 2 * ph - kh) // sh + 1
    Wo = (W + 2 * pw - kw) // sw + 1
    cols = [xp[:, :, a:a + st * To:st, i:i + sh * Ho:sh, j:j + sw * Wo:sw]
            for a in range(kt) for i in range(kh) for j in range(kw)]
    col = jnp.stack(cols, axis=2)                                  # (N,C,taps,To,Ho,Wo)
    col = col.transpose(0, 3, 4, 5, 1, 2).reshape(N * To * Ho * Wo,
                                                  C * kt * kh * kw)
    y = matmul_bias(col, w_p, b_p, n_out=n_out, relu=relu, out_dtype=out_dtype)
    return y.reshape(N, To, Ho, Wo, n_out).transpose(0, 4, 1, 2, 3)


@functools.partial(jax.jit, static_argnames=("n_out", "kshape", "stride", "relu",
                                             "out_dtype"))
def conv1d(x, w_p, b_p, *, n_out, kshape, stride, relu=False,
           out_dtype=jnp.bfloat16):
    N, C, L = x.shape
    _, Cw, k = kshape
    assert C == Cw
    Lo = (L - k) // stride + 1
    xb = x.astype(jnp.bfloat16)
    cols = [xb[:, :, i:i + stride * Lo:stride] for i in range(k)]
    col = jnp.stack(cols, axis=2)                                  # (N, C, k, Lo)
    col = col.transpose(0, 3, 1, 2).reshape(N * Lo, C * k)
    y = matmul_bias(col, w_p, b_p, n_out=n_out, relu=relu, out_dtype=out_dtype)
    return y.reshape(N, Lo, n_out).transpose(0, 2, 1)


# ---------------------------------------------------------------------------
# Parameter init (deterministic, kaiming-uniform style) and GEMM-ready prep
# ---------------------------------------------------------------------------
def _kaiming_uniform(key, shape):
    fan_in = math.prod(shape[1:])
    bound = math.sqrt(6.0 / fan_in)
    return jax.random.uniform(key, shape, jnp.float32, -bound, bound)


def _linear_init(key, out_f, in_f):
    k1, k2 = jax.random.split(key)
    bound = 1.0 / math.sqrt(in_f)
    w = jax.random.uniform(k1, (out_f, in_f), jnp.float32, -bound, bound)
    b = jax.random.uniform(k2, (out_f,), jnp.float32, -bound, bound)
    return w, b


def init_params(key, *, n_classes=500, alpha=2):
    keys = iter(jax.random.split(key, 64))
    p = {}
    # frontend3D
    p["f_conv1"] = _kaiming_uniform(next(keys), (64, 1, 3, 3, 3))
    p["f_conv2"] = _kaiming_uniform(next(keys), (64, 1, 3, 3, 3))   # depthwise
    p["f_conv3"] = _kaiming_uniform(next(keys), (64, 64, 3, 1, 1))
    # resnet (alpha blocks per stage)
    blocks = []
    in_planes = 64
    for planes, stride in [(64, 1), (128, 2), (256, 2), (512, 2)]:
        for s in [stride] + [1] * (alpha - 1):
            blk = {
                "conv1": _kaiming_uniform(next(keys), (planes, in_planes, 3, 3)),
                "conv2": _kaiming_uniform(next(keys), (planes, planes, 3, 3)),
                "stride": s,
            }
            if s != 1 or in_planes != planes:
                blk["conv_sc"] = _kaiming_uniform(next(keys),
                                                  (planes, in_planes, 1, 1))
            blocks.append(blk)
            in_planes = planes
    p["blocks"] = blocks
    p["fc_w"], p["fc_b"] = _linear_init(next(keys), 256, 512)
    # backend_conv1
    p["b_conv1"] = _kaiming_uniform(next(keys), (512, 256, 5))
    p["b_conv2"] = _kaiming_uniform(next(keys), (1024, 512, 5))
    # backend_conv2
    p["l1_w"], p["l1_b"] = _linear_init(next(keys), 256, 1024)
    p["l2_w"], p["l2_b"] = _linear_init(next(keys), n_classes, 256)
    return p


def _prep_gemm(w, *, bn_scale, bias=None):
    """conv/linear weight (O, ...) -> bf16 (K, Np) GEMM weight + fp32 bias."""
    O = int(w.shape[0])
    K = int(math.prod(w.shape[1:]))
    wm = w.reshape(O, K).T.astype(jnp.float32)
    if bn_scale:
        wm = wm * BN_SCALE
    Np = _round_up(O, 128)
    wp = jnp.pad(wm, ((0, 0), (0, Np - O))).astype(jnp.bfloat16)
    if bias is None:
        bp = jnp.zeros((1, Np), jnp.float32)
    else:
        b = bias.astype(jnp.float32) * (BN_SCALE if bn_scale else 1.0)
        bp = jnp.pad(b.reshape(1, O), ((0, 0), (0, Np - O)))
    return {"w": wp, "b": bp, "n": O, "kshape": tuple(int(d) for d in w.shape)}


def prepare_params(p):
    """One-time weight prep: reshape/transpose/pad/cast + BN-scale folding."""
    q = {
        "f_conv1": _prep_gemm(p["f_conv1"], bn_scale=True),
        "f_conv3": _prep_gemm(p["f_conv3"], bn_scale=False),
        "f_dw_w": p["f_conv2"][:, 0].transpose(1, 2, 3, 0)
                  .reshape(27, p["f_conv2"].shape[0]).astype(jnp.float32),
    }
    blocks = []
    for blk in p["blocks"]:
        nb = {"stride": blk["stride"],
              "conv1": _prep_gemm(blk["conv1"], bn_scale=True),
              "conv2": _prep_gemm(blk["conv2"], bn_scale=True)}
        if "conv_sc" in blk:
            nb["conv_sc"] = _prep_gemm(blk["conv_sc"], bn_scale=True)
        blocks.append(nb)
    q["blocks"] = blocks
    q["fc"] = _prep_gemm(p["fc_w"], bn_scale=True, bias=p["fc_b"])
    q["b_conv1"] = _prep_gemm(p["b_conv1"], bn_scale=True)
    q["b_conv2"] = _prep_gemm(p["b_conv2"], bn_scale=True)
    q["l1"] = _prep_gemm(p["l1_w"], bn_scale=True, bias=p["l1_b"])
    q["l2"] = _prep_gemm(p["l2_w"], bn_scale=False, bias=p["l2_b"])
    return q


# ---------------------------------------------------------------------------
# Forward pass
# ---------------------------------------------------------------------------
def _conv2d_layer(x, layer, *, stride, pad, relu, residual=None):
    return conv2d(x, layer["w"], layer["b"], residual, n_out=layer["n"],
                  kshape=layer["kshape"], stride=stride, pad=pad, relu=relu)


def _conv3d_layer(x, layer, *, stride, pad, relu):
    return conv3d(x, layer["w"], layer["b"], n_out=layer["n"],
                  kshape=layer["kshape"], stride=stride, pad=pad, relu=relu)


def _conv1d_layer(x, layer, *, stride, relu):
    return conv1d(x, layer["w"], layer["b"], n_out=layer["n"],
                  kshape=layer["kshape"], stride=stride, relu=relu)


def _res_block(x, blk):
    s = blk["stride"]
    out = _conv2d_layer(x, blk["conv1"], stride=s, pad=1, relu=True)
    if "conv_sc" in blk:
        sc = _conv2d_layer(x, blk["conv_sc"], stride=s, pad=0, relu=False)
    else:
        sc = x
    return _conv2d_layer(out, blk["conv2"], stride=1, pad=1, relu=True,
                         residual=sc)


def lipnext_forward(prep, x, *, frame_len=29, n_classes=500):
    # frontend3D: conv3d+BN+ReLU, depthwise conv3d, temporal conv3d
    x = _conv3d_layer(x, prep["f_conv1"], stride=(1, 2, 2), pad=(1, 1, 1),
                      relu=True)
    x = depthwise_conv3d_3x3x3(x, prep["f_dw_w"])
    x = _conv3d_layer(x, prep["f_conv3"], stride=(1, 1, 1), pad=(1, 0, 0),
                      relu=False)

    # (B, 64, T, H, W) -> (B*T, 64, H, W)
    B, C, T, H, W = x.shape
    x = x.transpose(0, 2, 1, 3, 4).reshape(B * T, C, H, W)

    # resnet
    for blk in prep["blocks"]:
        x = _res_block(x, blk)

    # AvgPool2d(2) + flatten (feature map is exactly 2x2 for 64x64 input)
    N, C, H, W = x.shape
    x = reduce_axis1(x.reshape(N, C, H * W).transpose(0, 2, 1), op="mean")

    # fc + bnfc (folded into the GEMM weight/bias)
    x = matmul_bias(x, prep["fc"]["w"], prep["fc"]["b"], n_out=prep["fc"]["n"],
                    relu=False, out_dtype=jnp.bfloat16)            # (B*T, 256)

    # (B*T, 256) -> (B, 256, T)
    x = x.reshape(B, frame_len, prep["fc"]["n"]).transpose(0, 2, 1)

    # backend_conv1: conv1d+BN+ReLU, MaxPool1d(2,2), conv1d+BN+ReLU
    x = _conv1d_layer(x, prep["b_conv1"], stride=2, relu=True)     # (B, 512, 13)
    Bc, Cc, Lc = x.shape
    Lp = Lc // 2
    xr = x[:, :, :Lp * 2].reshape(Bc, Cc, Lp, 2).transpose(0, 2, 3, 1)
    x = reduce_axis1(xr.reshape(Bc * Lp, 2, Cc), op="max")         # MaxPool1d(2,2)
    x = x.reshape(Bc, Lp, Cc).transpose(0, 2, 1)                   # (B, 512, 6)
    x = _conv1d_layer(x, prep["b_conv2"], stride=2, relu=True)     # (B, 1024, 1)

    # torch.mean(x, 2)
    x = reduce_axis1(x.transpose(0, 2, 1), op="mean")              # (B, 1024)

    # backend_conv2
    x = matmul_bias(x, prep["l1"]["w"], prep["l1"]["b"], n_out=256, relu=True,
                    out_dtype=jnp.bfloat16)
    x = matmul_bias(x, prep["l2"]["w"], prep["l2"]["b"], n_out=n_classes,
                    relu=False, out_dtype=jnp.float32)
    return x


if __name__ == "__main__":
    N_CLASSES = 500
    FRAME_LEN = 29                      # required by view(-1, frameLen, 256)
    key = jax.random.PRNGKey(0)
    pkey, xkey = jax.random.split(key)
    raw = init_params(pkey, n_classes=N_CLASSES, alpha=2)
    prep = prepare_params(raw)
    # input: (batch=1, channel=1, frames=29, 64, 64) -> resnet sees 16x16,
    # pools to 1x1 at the avgpool (smallest spatial size the module supports).
    x = jax.random.normal(xkey, (1, 1, FRAME_LEN, 64, 64), jnp.float32)
    out = lipnext_forward(prep, x, frame_len=FRAME_LEN, n_classes=N_CLASSES)
    out = jax.block_until_ready(out)
    assert out.shape == (1, N_CLASSES), out.shape
    assert bool(jnp.all(jnp.isfinite(out)))
    print("KERNEL_OK")
</pallas_src>

<mosaic_0001>
module attributes {stable_mosaic.version = 11 : i64} {
  func.func @_mm_kernel(%arg0: i32, %arg1: i32, %arg2: memref<512x27xbf16, #tpu.memory_space<vmem>>, %arg3: memref<27x128xbf16, #tpu.memory_space<vmem>>, %arg4: memref<1x128xf32, #tpu.memory_space<vmem>>, %arg5: memref<512x128xbf16, #tpu.memory_space<vmem>>) attributes {dimension_semantics = [#tpu.dimension_semantics<parallel>, #tpu.dimension_semantics<parallel>], iteration_bounds = array<i64: 58, 1>, scalar_prefetch = 0 : i64, scratch_operands = 0 : i64, tpu.core_type = #tpu.core_type<tc>, window_params = [{transform_indices = @transform_0, window_bounds = array<i64: 512, 27>}, {transform_indices = @transform_1, window_bounds = array<i64: 27, 128>}, {transform_indices = @transform_2, window_bounds = array<i64: 1, 128>}, {transform_indices = @transform_3, window_bounds = array<i64: 512, 128>}]} {
    %c0 = arith.constant 0 : index
    %c0_0 = arith.constant 0 : index
    %0 = vector.load %arg2[%c0, %c0_0] : memref<512x27xbf16, #tpu.memory_space<vmem>>, vector<512x27xbf16>
    %c0_1 = arith.constant 0 : index
    %c0_2 = arith.constant 0 : index
    %1 = vector.load %arg3[%c0_1, %c0_2] : memref<27x128xbf16, #tpu.memory_space<vmem>>, vector<27x128xbf16>
    %cst = arith.constant dense<0.000000e+00> : vector<512x128xf32>
    %2 = tpu.matmul %0, %1, %cst {dimension_numbers = #tpu.dot_dimension_numbers<[1], [0], [0], [1], [0, 0, 1, 1], [], []>} : vector<512x27xbf16>, vector<27x128xbf16>, vector<512x128xf32> -> vector<512x128xf32>
    %c0_3 = arith.constant 0 : index
    %c0_4 = arith.constant 0 : index
    %3 = vector.load %arg4[%c0_3, %c0_4] : memref<1x128xf32, #tpu.memory_space<vmem>>, vector<1x128xf32>
    %4 = vector.broadcast %3 : vector<1x128xf32> to vector<512x128xf32>
    %5 = arith.addf %2, %4 : vector<512x128xf32>
    %cst_5 = arith.constant 0.000000e+00 : f32
    %6 = vector.broadcast %cst_5 : f32 to vector<512x128xf32>
    %7 = arith.maximumf %5, %6 : vector<512x128xf32>
    %8 = arith.truncf %7 : vector<512x128xf32> to vector<512x128xbf16>
    %c0_6 = arith.constant 0 : index
    %c0_7 = arith.constant 0 : index
    %9 = vector.load %arg5[%c0_6, %c0_7] : memref<512x128xbf16, #tpu.memory_space<vmem>>, vector<512x128xbf16>
    tpu.vector_store %arg5[%c0_6, %c0_7], %8 {strides = array<i32>} : memref<512x128xbf16, #tpu.memory_space<vmem>>, vector<512x128xbf16>,
    return
  }
  func.func @transform_0(%arg0: i32, %arg1: i32) -> (i32, i32) {
    %c0_i32 = arith.constant 0 : i32
    %c0_i32_0 = arith.constant 0 : i32
    return %arg0, %c0_i32 : i32, i32
  }
  func.func @transform_1(%arg0: i32, %arg1: i32) -> (i32, i32) {
    %c0_i32 = arith.constant 0 : i32
    %c0_i32_0 = arith.constant 0 : i32
    return %c0_i32, %arg1 : i32, i32
  }
  func.func @transform_2(%arg0: i32, %arg1: i32) -> (i32, i32) {
    %c0_i32 = arith.constant 0 : i32
    %c0_i32_0 = arith.constant 0 : i32
    return %c0_i32, %arg1 : i32, i32
  }
  func.func @transform_3(%arg0: i32, %arg1: i32) -> (i32, i32) {
    %c0_i32 = arith.constant 0 : i32
    return %arg0, %arg1 : i32, i32
  }
}

</mosaic_0001>

<llo_original>
// kernel: matmul_bias.1
$region0: #{matmul_bias.1}
  #allocation0 [shape = 'u32[]', space=smem, size = 0x4, offset = 0x4, fixed_abs, tag = 'smem constant byte address 0x4 - core index']
  #allocation1 [shape = 'u32[144,128]{1,0:T(1,128)}', space=vmem, size = 0x12000, scoped, tag = 'internal scratch']
  %s0 = inlined_call_operand.vmem [shape: bf16[29696,27], index: 0, kind: input, shape index: {}]
  %s1 = inlined_call_operand.vmem [shape: bf16[27,128], index: 1, kind: input, shape index: {}]
  %s2 = inlined_call_operand.vmem [shape: f32[1,128], index: 2, kind: input, shape index: {}]
  %s3 = inlined_call_operand.vmem [shape: bf16[29696,128], index: 3, kind: output, shape index: {}]
  %s4 = sld [smem:[#allocation0]]
  $region45: #{matmul_bias.1} parent=0
    _
  %s6 = ssub.s32 1, %s4
  %s7 = scalar_select 0, %s6, %s4
  loop: start=0, step=1, limit=60
  $region2: #{matmul_bias.1} parent=0 // loop_pre_header
    _
  $region3: #{matmul_bias.1} parent=0 // loop_header
    %s9 = sphi 0, %s13
    %p10 = scmp.ge.s32.totalorder %s9, 60
    %s16 = sphi 0, %s28
    %s17 = sphi 0, %s24
    %s18 = sphi 0, %s16
    %s19 = sphi 0, %s17
    %s20 = sphi 0, %s18
    %s21 = sphi 0, %s19
    %s31 = sphi 0, %s33
    %s34 = sphi 0, %s31
    %s35 = sphi 0, %s34
    %s51 = sphi 0, %s35
    %s57 = sphi 0, %s59
    %s60 = sphi 0, %s57
    %s61 = sphi 0, %s60
    %s77 = sphi 0, %s61
    %s83 = sphi 0, %s85
    %s86 = sphi 0, %s83
    %s87 = sphi 0, %s86
    %s103 = sphi 0, %s87
    %s111 = sphi 0, %s113
    %s114 = sphi 0, %s111
    %s115 = sphi 0, %s114
    %s131 = sphi 0, %s115
  $region4: #{matmul_bias.1} parent=0 // loop_header_branch
    %12 = sbr.rel (%p10) target = $region8
  $region5: #{matmul_bias.1} parent=0 // loop_body
    %s14 = ssub.s32 %s9, 1
    %s15 = ssub.s32 %s9, 2
    %s22 = sadd.s32 1, %s17
    %p23 = scmp.ge.s32.totalorder %s22, 1
    %s24 = scalar_select %p23, 0, %s22
    %s25 = sadd.s32 1, %s16
    %s26 = scalar_select %p23, %s25, %s16
    %p27 = scmp.ge.s32.totalorder %s26, 58
    %s28 = scalar_select %p27, 0, %s26
    %s29 = ssub.s32 %s16, %s28
    %p30 = scmp.eq.s32.totalorder %s29, 0
    %s32 = sadd.s32 %s31, 1
    %s33 = scalar_select %p30, %s31, %s32
    %p36 = pneg %p30
    %p37 = scmp.eq.s32.totalorder %s9, 57
    %p38 = por %p36, %p37
    %p39 = scmp.ne.s32.totalorder %s31, %s34
    %p40 = scmp.eq.s32.totalorder %s9, 0
    %p41 = por %p39, %p40
    %p42 = scmp.ne.s32.totalorder %s31, %s34
    %p43 = scmp.eq.s32.totalorder %s14, 57
    %p44 = por %p42, %p43
    %p45 = scmp.ne.s32.totalorder %s34, %s35
    %p46 = scmp.eq.s32.totalorder %s14, 0
    %p47 = por %p45, %p46
    %p48 = scmp.ne.s32.totalorder %s34, %s35
    %p49 = scmp.eq.s32.totalorder %s15, 57
    %p50 = por %p48, %p49
    %p52 = scmp.ne.s32.totalorder %s35, %s51
    %p53 = scmp.eq.s32.totalorder %s15, 0
    %p54 = por %p52, %p53
    %s55 = ssub.s32 %s17, %s24
    %p56 = scmp.eq.s32.totalorder %s55, 0
    %s58 = sadd.s32 %s57, 1
    %s59 = scalar_select %p56, %s57, %s58
    %p62 = pneg %p56
    %p63 = scmp.eq.s32.totalorder %s9, 57
    %p64 = por %p62, %p63
    %p65 = scmp.ne.s32.totalorder %s57, %s60
    %p66 = scmp.eq.s32.totalorder %s9, 0
    %p67 = por %p65, %p66
    %p68 = scmp.ne.s32.totalorder %s57, %s60
    %p69 = scmp.eq.s32.totalorder %s14, 57
    %p70 = por %p68, %p69
    %p71 = scmp.ne.s32.totalorder %s60, %s61
    %p72 = scmp.eq.s32.totalorder %s14, 0
    %p73 = por %p71, %p72
    %p74 = scmp.ne.s32.totalorder %s60, %s61
    %p75 = scmp.eq.s32.totalorder %s15, 57
    %p76 = por %p74, %p75
    %p78 = scmp.ne.s32.totalorder %s61, %s77
    %p79 = scmp.eq.s32.totalorder %s15, 0
    %p80 = por %p78, %p79
    %s81 = ssub.s32 %s17, %s24
    %p82 = scmp.eq.s32.totalorder %s81, 0
    %s84 = sadd.s32 %s83, 1
    %s85 = scalar_select %p82, %s83, %s84
    %p88 = pneg %p82
    %p89 = scmp.eq.s32.totalorder %s9, 57
    %p90 = por %p88, %p89
    %p91 = scmp.ne.s32.totalorder %s83, %s86
    %p92 = scmp.eq.s32.totalorder %s9, 0
    %p93 = por %p91, %p92
    %p94 = scmp.ne.s32.totalorder %s83, %s86
    %p95 = scmp.eq.s32.totalorder %s14, 57
    %p96 = por %p94, %p95
    %p97 = scmp.ne.s32.totalorder %s86, %s87
    %p98 = scmp.eq.s32.totalorder %s14, 0
    %p99 = por %p97, %p98
    %p100 = scmp.ne.s32.totalorder %s86, %s87
    %p101 = scmp.eq.s32.totalorder %s15, 57
    %p102 = por %p100, %p101
    %p104 = scmp.ne.s32.totalorder %s87, %s103
    %p105 = scmp.eq.s32.totalorder %s15, 0
    %p106 = por %p104, %p105
    %s107 = ssub.s32 %s16, %s28
    %s108 = ssub.s32 %s17, %s24
    %s109 = sor.u32 %s107, %s108
    %p110 = scmp.eq.s32.totalorder %s109, 0
    %s112 = sadd.s32 %s111, 1
    %s113 = scalar_select %p110, %s111, %s112
    %p116 = pneg %p110
    %p117 = scmp.eq.s32.totalorder %s9, 57
    %p118 = por %p116, %p117
    %p119 = scmp.ne.s32.totalorder %s111, %s114
    %p120 = scmp.eq.s32.totalorder %s9, 0
    %p121 = por %p119, %p120
    %p122 = scmp.ne.s32.totalorder %s111, %s114
    %p123 = scmp.eq.s32.totalorder %s14, 57
    %p124 = por %p122, %p123
    %p125 = scmp.ne.s32.totalorder %s114, %s115
    %p126 = scmp.eq.s32.totalorder %s14, 0
    %p127 = por %p125, %p126
    %p128 = scmp.ne.s32.totalorder %s114, %s115
    %p129 = scmp.eq.s32.totalorder %s15, 57
    %p130 = por %p128, %p129
    %p132 = scmp.ne.s32.totalorder %s115, %s131
    %p133 = scmp.eq.s32.totalorder %s15, 0
    %p134 = por %p132, %p133
    %p135 = scmp.le.s32.totalorder 1, %s9
    %p136 = scmp.lt.s32.totalorder %s9, 59
    %p137 = pnand %p135, %p136
    %p138 = pneg %p137
    // Predicated region
    $region9: #{matmul_bias.1} parent=5 // pred_check
      _
    $region10: #{matmul_bias.1} parent=5 // pred_check_branch
      %140 = sbr.rel (%p137) target = $region12
    $region11: #{matmul_bias.1} parent=5 // pred_region
      %s141 = ssub.s32 %s9, 1
      // Predicated region
      $region13: #{matmul_bias.1} parent=11 // pred_check
        %p142 = pneg %p73
      $region14: #{matmul_bias.1} parent=11 // pred_check_branch
        %144 = sbr.rel (%p142) target = $region16
      $region15: #{matmul_bias.1} parent=11 // pred_region
        %p145 = scmp.lt.s32.totalorder %s19, 0
        %s146 = scalar_select %p145, %s19, 0
        %s147 = smul.addr %s146, 4
        %s148 = scalar_lea.vmem %s1, %s147
      $region16: #{matmul_bias.1} parent=11 // pred_fallthru
        _
      // Predicated region
      $region17: #{matmul_bias.1} parent=11 // pred_check
        %p149 = pneg %p99
      $region18: #{matmul_bias.1} parent=11 // pred_check_branch
        %151 = sbr.rel (%p149) target = $region20
      $region19: #{matmul_bias.1} parent=11 // pred_region
        %p152 = scmp.lt.s32.totalorder %s19, 0
        %s153 = scalar_select %p152, %s19, 0
        %s154 = scalar_lea.vmem %s2, %s153
      $region20: #{matmul_bias.1} parent=11 // pred_fallthru
        _
    $region12: #{matmul_bias.1} parent=5 // pred_fallthru
      _
    %p155 = scmp.lt.s32.totalorder %s9, 58
    // Predicated region
    $region21: #{matmul_bias.1} parent=5 // pred_check
      %p156 = pneg %p155
    $region22: #{matmul_bias.1} parent=5 // pred_check_branch
      %158 = sbr.rel (%p156) target = $region24
    $region23: #{matmul_bias.1} parent=5 // pred_region
      // Predicated region
      $region25: #{matmul_bias.1} parent=23 // pred_check
        %p159 = pneg %p41
      $region26: #{matmul_bias.1} parent=23 // pred_check_branch
        %161 = sbr.rel (%p159) target = $region28
      $region27: #{matmul_bias.1} parent=23 // pred_region
        %s162 = smul.u32 64, %s16
        %p163 = scmp.lt.s32.totalorder %s162, 3711
        %s164 = scalar_select %p163, %s162, 3711
        %s165 = smul.addr %s164, 4
        %s166 = scalar_lea.vmem %s0, %s165
        %s167 = smul.u32 64, %s16
      $region28: #{matmul_bias.1} parent=23 // pred_fallthru
        _
    $region24: #{matmul_bias.1} parent=5 // pred_fallthru
      _
    %p168 = scmp.le.s32.totalorder 1, %s9
    %p169 = scmp.lt.s32.totalorder %s9, 59
    %p170 = pnand %p168, %p169
    %p171 = pneg %p170
    // Predicated region
    $region29: #{matmul_bias.1} parent=5 // pred_check
      _
    $region30: #{matmul_bias.1} parent=5 // pred_check_branch
      %173 = sbr.rel (%p170) target = $region32
    $region31: #{matmul_bias.1} parent=5 // pred_region
      %s174 = ssub.s32 %s9, 1
      %s175 = smul.u32 64, %s18
      %p176 = scmp.lt.s32.totalorder %s175, 3711
      %s177 = scalar_select %p176, %s175, 3711
      %s178 = smul.addr %s177, 4
      %s179 = scalar_lea.vmem %s0, %s178
      %p180 = pneg %p47
      %p181 = pneg %p44
      %p182 = scmp.lt.s32.totalorder %s19, 0
      %s183 = scalar_select %p182, %s19, 0
      %s184 = smul.addr %s183, 4
      %s185 = scalar_lea.vmem %s1, %s184
      %p186 = pneg %p73
      %p187 = pneg %p70
      %p188 = scmp.lt.s32.totalorder %s19, 0
      %s189 = scalar_select %p188, %s19, 0
      %s190 = scalar_lea.vmem %s2, %s189
      %p191 = pneg %p99
      %p192 = pneg %p96
      %p193 = pneg %p127
      %p194 = pneg %p124
      %s195 = smul.u32 64, %s18
      %p196 = scmp.lt.s32.totalorder %s195, 3711
      %s197 = scalar_select %p196, %s195, 3711
      %p198 = scmp.lt.s32.totalorder %s19, 0
      %s199 = scalar_select %p198, %s19, 0
      %s200 = sadd.s32 %s199, %s197
      %s201 = smul.addr %s200, 4
      %s202 = scalar_lea.vmem %s3, %s201
      %s203 = smul.u32 64, %s18
      %p204 = scmp.lt.s32.totalorder %s203, 3711
      %s205 = scalar_select %p204, %s203, 3711
      %s206 = smul.addr %s205, 4
      %s207 = scalar_lea.vmem %s0, %s206
      %s208 = smul.u32 64, %s18
      %p209 = scmp.lt.s32.totalorder %s19, 0
      %s210 = scalar_select %p209, %s19, 0
      %s211 = smul.addr %s210, 4
      %s212 = scalar_lea.vmem %s1, %s211
      %p213 = scmp.lt.s32.totalorder %s19, 0
      %s214 = scalar_select %p213, %s19, 0
      %s215 = scalar_lea.vmem %s2, %s214
      %s216 = smul.u32 64, %s18
      %p217 = scmp.lt.s32.totalorder %s216, 3711
      %s218 = scalar_select %p217, %s216, 3711
      %p219 = scmp.lt.s32.totalorder %s19, 0
      %s220 = scalar_select %p219, %s19, 0
      %s221 = sadd.s32 %s220, %s218
      %s222 = smul.addr %s221, 4
      %s223 = scalar_lea.vmem %s3, %s222
      %s224 = smul.u32 64, %s18
      %v226 = vld [vmem:[%s207] sm:$0xf]
      %v227 = vld [vmem:[%s207 + $0x4] sm:$0xf]
      %v228 = vld [vmem:[%s207 + $0x8] sm:$0xf]
      %v229 = vld [vmem:[%s207 + $0xc] sm:$0xf]
      %v230 = vld [vmem:[%s207 + $0x10] sm:$0xf]
      %v231 = vld [vmem:[%s207 + $0x14] sm:$0xf]
      %v232 = vld [vmem:[%s207 + $0x18] sm:$0xf]
      %v233 = vld [vmem:[%s207 + $0x1c] sm:$0xf]
      %v234 = vld [vmem:[%s207 + $0x20] sm:$0xf]
      %v235 = vld [vmem:[%s207 + $0x24] sm:$0xf]
      %v236 = vld [vmem:[%s207 + $0x28] sm:$0xf]
      %v237 = vld [vmem:[%s207 + $0x2c] sm:$0xf]
      %v238 = vld [vmem:[%s207 + $0x30] sm:$0xf]
      %v239 = vld [vmem:[%s207 + $0x34] sm:$0xf]
      %v240 = vld [vmem:[%s207 + $0x38] sm:$0xf]
      %v241 = vld [vmem:[%s207 + $0x3c] sm:$0xf]
      %v242 = vld [vmem:[%s207 + $0x40] sm:$0xf]
      %v243 = vld [vmem:[%s207 + $0x44] sm:$0xf]
      %v244 = vld [vmem:[%s207 + $0x48] sm:$0xf]
      %v245 = vld [vmem:[%s207 + $0x4c] sm:$0xf]
      %v246 = vld [vmem:[%s207 + $0x50] sm:$0xf]
      %v247 = vld [vmem:[%s207 + $0x54] sm:$0xf]
      %v248 = vld [vmem:[%s207 + $0x58] sm:$0xf]
      %v249 = vld [vmem:[%s207 + $0x5c] sm:$0xf]
      %v250 = vld [vmem:[%s207 + $0x60] sm:$0xf]
      %v251 = vld [vmem:[%s207 + $0x64] sm:$0xf]
      %v252 = vld [vmem:[%s207 + $0x68] sm:$0xf]
      %v253 = vld [vmem:[%s207 + $0x6c] sm:$0xf]
      %v254 = vld [vmem:[%s207 + $0x70] sm:$0xf]
      %v255 = vld [vmem:[%s207 + $0x74] sm:$0xf]
      %v256 = vld [vmem:[%s207 + $0x78] sm:$0xf]
      %v257 = vld [vmem:[%s207 + $0x7c] sm:$0xf]
      %v258 = vld [vmem:[%s207 + $0x80] sm:$0xf]
      %v259 = vld [vmem:[%s207 + $0x84] sm:$0xf]
      %v260 = vld [vmem:[%s207 + $0x88] sm:$0xf]
      %v261 = vld [vmem:[%s207 + $0x8c] sm:$0xf]
      %v262 = vld [vmem:[%s207 + $0x90] sm:$0xf]
      %v263 = vld [vmem:[%s207 + $0x94] sm:$0xf]
      %v264 = vld [vmem:[%s207 + $0x98] sm:$0xf]
      %v265 = vld [vmem:[%s207 + $0x9c] sm:$0xf]
      %v266 = vld [vmem:[%s207 + $0xa0] sm:$0xf]
      %v267 = vld [vmem:[%s207 + $0xa4] sm:$0xf]
      %v268 = vld [vmem:[%s207 + $0xa8] sm:$0xf]
      %v269 = vld [vmem:[%s207 + $0xac] sm:$0xf]
      %v270 = vld [vmem:[%s207 + $0xb0] sm:$0xf]
      %v271 = vld [vmem:[%s207 + $0xb4] sm:$0xf]
      %v272 = vld [vmem:[%s207 + $0xb8] sm:$0xf]
      %v273 = vld [vmem:[%s207 + $0xbc] sm:$0xf]
      %v274 = vld [vmem:[%s207 + $0xc0] sm:$0xf]
      %v275 = vld [vmem:[%s207 + $0xc4] sm:$0xf]
      %v276 = vld [vmem:[%s207 + $0xc8] sm:$0xf]
      %v277 = vld [vmem:[%s207 + $0xcc] sm:$0xf]
      %v278 = vld [vmem:[%s207 + $0xd0] sm:$0xf]
      %v279 = vld [vmem:[%s207 + $0xd4] sm:$0xf]
      %v280 = vld [vmem:[%s207 + $0xd8] sm:$0xf]
      %v281 = vld [vmem:[%s207 + $0xdc] sm:$0xf]
      %v282 = vld [vmem:[%s207 + $0xe0] sm:$0xf]
      %v283 = vld [vmem:[%s207 + $0xe4] sm:$0xf]
      %v284 = vld [vmem:[%s207 + $0xe8] sm:$0xf]
      %v285 = vld [vmem:[%s207 + $0xec] sm:$0xf]
      %v286 = vld [vmem:[%s207 + $0xf0] sm:$0xf]
      %v287 = vld [vmem:[%s207 + $0xf4] sm:$0xf]
      %v288 = vld [vmem:[%s207 + $0xf8] sm:$0xf]
      %v289 = vld [vmem:[%s207 + $0xfc] sm:$0xf]
      %v290 = vld [vmem:[%s212] sm:$0xf]
      %v291 = vld [vmem:[%s212 + $0x4] sm:$0xf]
      %v292 = vld [vmem:[%s212 + $0x8] sm:$0xf]
      %v293 = vld [vmem:[%s212 + $0xc] sm:$0x3]
      %v294 = vld [vmem:[%s215] sm:$0x1]
      %v296 = vlaneseq
      %v297 = vshrl.u32 %v296, 7
      %v298 = vsub.s32 0, %v297
      %v299 = vrot.slane %v294, %v298
      %v365 = vunpack.c.l.b16 %v226
      %v366 = vunpack.c.l.b16 %v227
      %v367 = vunpack.c.l.b16 %v228
      %v368 = vunpack.c.l.b16 %v229
      %v369 = vunpack.c.l.b16 %v230
      %v370 = vunpack.c.l.b16 %v231
      %v371 = vunpack.c.l.b16 %v232
      %v372 = vunpack.c.l.b16 %v233
      %v373 = vunpack.c.l.b16 %v234
      %v374 = vunpack.c.l.b16 %v235
      %v375 = vunpack.c.l.b16 %v236
      %v376 = vunpack.c.l.b16 %v237
      %v377 = vunpack.c.l.b16 %v238
      %v378 = vunpack.c.l.b16 %v239
      %v379 = vunpack.c.l.b16 %v240
      %v380 = vunpack.c.l.b16 %v241
      %v381 = vunpack.c.l.b16 %v242
      %v382 = vunpack.c.l.b16 %v243
      %v383 = vunpack.c.l.b16 %v244
      %v384 = vunpack.c.l.b16 %v245
      %v385 = vunpack.c.l.b16 %v246
      %v386 = vunpack.c.l.b16 %v247
      %v387 = vunpack.c.l.b16 %v248
      %v388 = vunpack.c.l.b16 %v249
      %v389 = vunpack.c.l.b16 %v250
      %v390 = vunpack.c.l.b16 %v251
      %v391 = vunpack.c.l.b16 %v252
      %v392 = vunpack.c.l.b16 %v253
      %v393 = vunpack.c.l.b16 %v254
      %v394 = vunpack.c.l.b16 %v255
      %v395 = vunpack.c.l.b16 %v256
      %v396 = vunpack.c.l.b16 %v257
      %v397 = vunpack.c.l.b16 %v258
      %v398 = vunpack.c.l.b16 %v259
      %v399 = vunpack.c.l.b16 %v260
      %v400 = vunpack.c.l.b16 %v261
      %v401 = vunpack.c.l.b16 %v262
      %v402 = vunpack.c.l.b16 %v263
      %v403 = vunpack.c.l.b16 %v264
      %v404 = vunpack.c.l.b16 %v265
      %v405 = vunpack.c.l.b16 %v266
      %v406 = vunpack.c.l.b16 %v267
      %v407 = vunpack.c.l.b16 %v268
      %v408 = vunpack.c.l.b16 %v269
      %v409 = vunpack.c.l.b16 %v270
      %v410 = vunpack.c.l.b16 %v271
      %v411 = vunpack.c.l.b16 %v272
      %v412 = vunpack.c.l.b16 %v273
      %v413 = vunpack.c.l.b16 %v274
      %v414 = vunpack.c.l.b16 %v275
      %v415 = vunpack.c.l.b16 %v276
      %v416 = vunpack.c.l.b16 %v277
      %v417 = vunpack.c.l.b16 %v278
      %v418 = vunpack.c.l.b16 %v279
      %v419 = vunpack.c.l.b16 %v280
      %v420 = vunpack.c.l.b16 %v281
      %v421 = vunpack.c.l.b16 %v282
      %v422 = vunpack.c.l.b16 %v283
      %v423 = vunpack.c.l.b16 %v284
      %v424 = vunpack.c.l.b16 %v285
      %v425 = vunpack.c.l.b16 %v286
      %v426 = vunpack.c.l.b16 %v287
      %v427 = vunpack.c.l.b16 %v288
      %v428 = vunpack.c.l.b16 %v289
      %v429 = vpack.c.b16 %v366, %v365
      %v430 = vpack.c.b16 %v368, %v367
      %v431 = vpack.c.b16 %v370, %v369
      %v432 = vpack.c.b16 %v372, %v371
      %v433 = vpack.c.b16 %v374, %v373
      %v434 = vpack.c.b16 %v376, %v375
      %v435 = vpack.c.b16 %v378, %v377
      %v436 = vpack.c.b16 %v380, %v379
      %v437 = vpack.c.b16 %v382, %v381
      %v438 = vpack.c.b16 %v384, %v383
      %v439 = vpack.c.b16 %v386, %v385
      %v440 = vpack.c.b16 %v388, %v387
      %v441 = vpack.c.b16 %v390, %v389
      %v442 = vpack.c.b16 %v392, %v391
      %v443 = vpack.c.b16 %v394, %v393
      %v444 = vpack.c.b16 %v396, %v395
      %v445 = vpack.c.b16 %v398, %v397
      %v446 = vpack.c.b16 %v400, %v399
      %v447 = vpack.c.b16 %v402, %v401
      %v448 = vpack.c.b16 %v404, %v403
      %v449 = vpack.c.b16 %v406, %v405
      %v450 = vpack.c.b16 %v408, %v407
      %v451 = vpack.c.b16 %v410, %v409
      %v452 = vpack.c.b16 %v412, %v411
      %v453 = vpack.c.b16 %v414, %v413
      %v454 = vpack.c.b16 %v416, %v415
      %v455 = vpack.c.b16 %v418, %v417
      %v456 = vpack.c.b16 %v420, %v419
      %v457 = vpack.c.b16 %v422, %v421
      %v458 = vpack.c.b16 %v424, %v423
      %v459 = vpack.c.b16 %v426, %v425
      %v460 = vpack.c.b16 %v428, %v427
      %v465 = vunpack.c.l.b16 %v290
      %v466 = vunpack.c.l.b16 %v291
      %v467 = vunpack.c.l.b16 %v292
      %v468 = vunpack.c.l.b16 %v293
      %v469 = vpack.c.b16 %v466, %v465
      %v470 = vpack.c.b16 %v468, %v467
      %vm472 = vcmask 220160
      %v474 = vsel %vm472, %v429, 0
      %v477 = vsel %vm472, %v430, 0
      %v480 = vsel %vm472, %v431, 0
      %v483 = vsel %vm472, %v432, 0
      %v486 = vsel %vm472, %v433, 0
      %v489 = vsel %vm472, %v434, 0
      %v492 = vsel %vm472, %v435, 0
      %v495 = vsel %vm472, %v436, 0
      %v498 = vsel %vm472, %v437, 0
      %v501 = vsel %vm472, %v438, 0
      %v504 = vsel %vm472, %v439, 0
      %v507 = vsel %vm472, %v440, 0
      %v510 = vsel %vm472, %v441, 0
      %v513 = vsel %vm472, %v442, 0
      %v516 = vsel %vm472, %v443, 0
      %v519 = vsel %vm472, %v444, 0
      %v522 = vsel %vm472, %v445, 0
      %v525 = vsel %vm472, %v446, 0
      %v528 = vsel %vm472, %v447, 0
      %v531 = vsel %vm472, %v448, 0
      %v534 = vsel %vm472, %v449, 0
      %v537 = vsel %vm472, %v450, 0
      %v540 = vsel %vm472, %v451, 0
      %v543 = vsel %vm472, %v452, 0
      %v546 = vsel %vm472, %v453, 0
      %v549 = vsel %vm472, %v454, 0
      %v552 = vsel %vm472, %v455, 0
      %v555 = vsel %vm472, %v456, 0
      %v558 = vsel %vm472, %v457, 0
      %v561 = vsel %vm472, %v458, 0
      %v564 = vsel %vm472, %v459, 0
      %v567 = vsel %vm472, %v460, 0
      %vm569 = vcmask 1044480
      %vm570 = vcmask 1045504
      %v571 = vsel %vm569, 4294967295, 65535
      %v572 = vsel %vm570, %v571, 0
      %v574 = vand.u32 %v470, %v572
      %576 = vmatprep.subr.bf16.mxu0 0
      %577 = vmatpush1.bf16.msra.mxu0 0
      %578 = vmatprep.subr.bf16.mxu0 0
      %579 = vmatpush1.bf16.msra.mxu0 0
      %580 = vmatprep.subr.bf16.mxu0 0
      %581 = vmatpush1.bf16.msra.mxu0 0
      %582 = vmatprep.subr.bf16.mxu0 0
      %583 = vmatpush1.bf16.msra.mxu0 0
      %584 = vmatprep.subr.bf16.mxu0 0
      %585 = vmatpush1.bf16.msra.mxu0 0
      %586 = vmatprep.subr.bf16.mxu0 0
      %587 = vmatpush1.bf16.msra.mxu0 0
      %588 = vmatprep.subr.bf16.mxu0 0
      %589 = vmatpush1.bf16.msra.mxu0 %v574
      %590 = vmatprep.subr.bf16.mxu0 0
      %591 = vmatpush1.bf16.msra.mxu0 %v469
      %592 = vmatprep.subr.bf16.mxu0 0
      %593 = vmatpush2.bf16.msra.mxu0 0
      %594 = vmatprep.subr.bf16.mxu0 0
      %595 = vmatpush2.bf16.msra.mxu0 0
      %596 = vmatprep.subr.bf16.mxu0 0
      %597 = vmatpush2.bf16.msra.mxu0 0
      %598 = vmatprep.subr.bf16.mxu0 0
      %599 = vmatpush2.bf16.msra.mxu0 0
      %600 = vmatprep.subr.bf16.mxu0 0
      %601 = vmatpush2.bf16.msra.mxu0 0
      %602 = vmatprep.subr.bf16.mxu0 0
      %603 = vmatpush2.bf16.msra.mxu0 0
      %604 = vmatprep.subr.bf16.mxu0 0
      %605 = vmatpush2.bf16.msra.mxu0 0
      %606 = vmatprep.subr.bf16.mxu0 0
      %607 = vmatpush2.bf16.msra.mxu0 0
      %608 = vmatprep.mubr.bf16.mxu0 0
      %609 = vmatmul.mubr.bf16.gmra.mxu0 %v474
      %v610 = vpop.f32.mrf.mxu0
      %v611 = vadd.f32 %v299, %v610
      %v612 = vpop.f32.mrf.mxu0
      %v613 = vpop.f32.mrf.mxu0
      %v614 = vadd.f32 %v299, %v613
      %v615 = vpop.f32.mrf.mxu0
      %616 = vmatprep.mubr.bf16.mxu0 0
      %617 = vmatmul.mubr.bf16.gmra.mxu0 %v477
      %v618 = vpop.f32.mrf.mxu0
      %v619 = vadd.f32 %v299, %v618
      %v620 = vpop.f32.mrf.mxu0
      %v621 = vpop.f32.mrf.mxu0
      %v622 = vadd.f32 %v299, %v621
      %v623 = vpop.f32.mrf.mxu0
      %624 = vmatprep.mubr.bf16.mxu0 0
      %625 = vmatmul.mubr.bf16.gmra.mxu0 %v480
      %v626 = vpop.f32.mrf.mxu0
      %v627 = vadd.f32 %v299, %v626
      %v628 = vpop.f32.mrf.mxu0
      %v629 = vpop.f32.mrf.mxu0
      %v630 = vadd.f32 %v299, %v629
      %v631 = vpop.f32.mrf.mxu0
      %632 = vmatprep.mubr.bf16.mxu0 0
      %633 = vmatmul.mubr.bf16.gmra.mxu0 %v483
      %v634 = vpop.f32.mrf.mxu0
      %v635 = vadd.f32 %v299, %v634
      %v636 = vpop.f32.mrf.mxu0
      %v637 = vpop.f32.mrf.mxu0
      %v638 = vadd.f32 %v299, %v637
      %v639 = vpop.f32.mrf.mxu0
      %640 = vmatprep.mubr.bf16.mxu0 0
      %641 = vmatmul.mubr.bf16.gmra.mxu0 %v486
      %v642 = vpop.f32.mrf.mxu0
      %v643 = vadd.f32 %v299, %v642
      %v644 = vpop.f32.mrf.mxu0
      %v645 = vpop.f32.mrf.mxu0
      %v646 = vadd.f32 %v299, %v645
      %v647 = vpop.f32.mrf.mxu0
      %648 = vmatprep.mubr.bf16.mxu0 0
      %649 = vmatmul.mubr.bf16.gmra.mxu0 %v489
      %v650 = vpop.f32.mrf.mxu0
      %v651 = vadd.f32 %v299, %v650
      %v652 = vpop.f32.mrf.mxu0
      %v653 = vpop.f32.mrf.mxu0
      %v654 = vadd.f32 %v299, %v653
      %v655 = vpop.f32.mrf.mxu0
      %656 = vmatprep.mubr.bf16.mxu0 0
      %657 = vmatmul.mubr.bf16.gmra.mxu0 %v492
      %v658 = vpop.f32.mrf.mxu0
      %v659 = vadd.f32 %v299, %v658
      %v660 = vpop.f32.mrf.mxu0
      %v661 = vpop.f32.mrf.mxu0
      %v662 = vadd.f32 %v299, %v661
      %v663 = vpop.f32.mrf.mxu0
      %664 = vmatprep.mubr.bf16.mxu0 0
      %665 = vmatmul.mubr.bf16.gmra.mxu0 %v495
      %v666 = vpop.f32.mrf.mxu0
      %v667 = vadd.f32 %v299, %v666
      %v668 = vpop.f32.mrf.mxu0
      %v669 = vpop.f32.mrf.mxu0
      %v670 = vadd.f32 %v299, %v669
      %v671 = vpop.f32.mrf.mxu0
      %672 = vmatprep.mubr.bf16.mxu0 0
      %673 = vmatmul.mubr.bf16.gmra.mxu0 %v498
      %v674 = vpop.f32.mrf.mxu0
      %v675 = vadd.f32 %v299, %v674
      %v676 = vpop.f32.mrf.mxu0
      %v677 = vpop.f32.mrf.mxu0
      %v678 = vadd.f32 %v299, %v677
      %v679 = vpop.f32.mrf.mxu0
      %680 = vmatprep.mubr.bf16.mxu0 0
      %681 = vmatmul.mubr.bf16.gmra.mxu0 %v501
      %v682 = vpop.f32.mrf.mxu0
      %v683 = vadd.f32 %v299, %v682
      %v684 = vpop.f32.mrf.mxu0
      %v685 = vpop.f32.mrf.mxu0
      %v686 = vadd.f32 %v299, %v685
      %v687 = vpop.f32.mrf.mxu0
      %688 = vmatprep.mubr.bf16.mxu0 0
      %689 = vmatmul.mubr.bf16.gmra.mxu0 %v504
      %v690 = vpop.f32.mrf.mxu0
      %v691 = vadd.f32 %v299, %v690
      %v692 = vpop.f32.mrf.mxu0
      %v693 = vpop.f32.mrf.mxu0
      %v694 = vadd.f32 %v299, %v693
      %v695 = vpop.f32.mrf.mxu0
      %696 = vmatprep.mubr.bf16.mxu0 0
      %697 = vmatmul.mubr.bf16.gmra.mxu0 %v507
      %v698 = vpop.f32.mrf.mxu0
      %v699 = vadd.f32 %v299, %v698
      %v700 = vpop.f32.mrf.mxu0
      %v701 = vpop.f32.mrf.mxu0
      %v702 = vadd.f32 %v299, %v701
      %v703 = vpop.f32.mrf.mxu0
      %704 = vmatprep.mubr.bf16.mxu0 0
      %705 = vmatmul.mubr.bf16.gmra.mxu0 %v510
      %v706 = vpop.f32.mrf.mxu0
      %v707 = vadd.f32 %v299, %v706
      %v708 = vpop.f32.mrf.mxu0
      %v709 = vpop.f32.mrf.mxu0
      %v710 = vadd.f32 %v299, %v709
      %v711 = vpop.f32.mrf.mxu0
      %712 = vmatprep.mubr.bf16.mxu0 0
      %713 = vmatmul.mubr.bf16.gmra.mxu0 %v513
      %v714 = vpop.f32.mrf.mxu0
      %v715 = vadd.f32 %v299, %v714
      %v716 = vpop.f32.mrf.mxu0
      %v717 = vpop.f32.mrf.mxu0
      %v718 = vadd.f32 %v299, %v717
      %v719 = vpop.f32.mrf.mxu0
      %720 = vmatprep.mubr.bf16.mxu0 0
      %721 = vmatmul.mubr.bf16.gmra.mxu0 %v516
      %v722 = vpop.f32.mrf.mxu0
      %v723 = vadd.f32 %v299, %v722
      %v724 = vpop.f32.mrf.mxu0
      %v725 = vpop.f32.mrf.mxu0
      %v726 = vadd.f32 %v299, %v725
      %v727 = vpop.f32.mrf.mxu0
      %728 = vmatprep.mubr.bf16.mxu0 0
      %729 = vmatmul.mubr.bf16.gmra.mxu0 %v519
      %v730 = vpop.f32.mrf.mxu0
      %v731 = vadd.f32 %v299, %v730
      %v732 = vpop.f32.mrf.mxu0
      %v733 = vpop.f32.mrf.mxu0
      %v734 = vadd.f32 %v299, %v733
      %v735 = vpop.f32.mrf.mxu0
      %736 = vmatprep.mubr.bf16.mxu0 0
      %737 = vmatmul.mubr.bf16.gmra.mxu0 %v522
      %v738 = vpop.f32.mrf.mxu0
      %v739 = vadd.f32 %v299, %v738
      %v740 = vpop.f32.mrf.mxu0
      %v741 = vpop.f32.mrf.mxu0
      %v742 = vadd.f32 %v299, %v741
      %v743 = vpop.f32.mrf.mxu0
      %744 = vmatprep.mubr.bf16.mxu0 0
      %745 = vmatmul.mubr.bf16.gmra.mxu0 %v525
      %v746 = vpop.f32.mrf.mxu0
      %v747 = vadd.f32 %v299, %v746
      %v748 = vpop.f32.mrf.mxu0
      %v749 = vpop.f32.mrf.mxu0
      %v750 = vadd.f32 %v299, %v749
      %v751 = vpop.f32.mrf.mxu0
      %752 = vmatprep.mubr.bf16.mxu0 0
      %753 = vmatmul.mubr.bf16.gmra.mxu0 %v528
      %v754 = vpop.f32.mrf.mxu0
      %v755 = vadd.f32 %v299, %v754
      %v756 = vpop.f32.mrf.mxu0
      %v757 = vpop.f32.mrf.mxu0
      %v758 = vadd.f32 %v299, %v757
      %v759 = vpop.f32.mrf.mxu0
      %760 = vmatprep.mubr.bf16.mxu0 0
      %761 = vmatmul.mubr.bf16.gmra.mxu0 %v531
      %v762 = vpop.f32.mrf.mxu0
      %v763 = vadd.f32 %v299, %v762
      %v764 = vpop.f32.mrf.mxu0
      %v765 = vpop.f32.mrf.mxu0
      %v766 = vadd.f32 %v299, %v765
      %v767 = vpop.f32.mrf.mxu0
      %768 = vmatprep.mubr.bf16.mxu0 0
      %769 = vmatmul.mubr.bf16.gmra.mxu0 %v534
      %v770 = vpop.f32.mrf.mxu0
      %v771 = vadd.f32 %v299, %v770
      %v772 = vpop.f32.mrf.mxu0
      %v773 = vpop.f32.mrf.mxu0
      %v774 = vadd.f32 %v299, %v773
      %v775 = vpop.f32.mrf.mxu0
      %776 = vmatprep.mubr.bf16.mxu0 0
      %777 = vmatmul.mubr.bf16.gmra.mxu0 %v537
      %v778 = vpop.f32.mrf.mxu0
      %v779 = vadd.f32 %v299, %v778
      %v780 = vpop.f32.mrf.mxu0
      %v781 = vpop.f32.mrf.mxu0
      %v782 = vadd.f32 %v299, %v781
      %v783 = vpop.f32.mrf.mxu0
      %784 = vmatprep.mubr.bf16.mxu0 0
      %785 = vmatmul.mubr.bf16.gmra.mxu0 %v540
      %v786 = vpop.f32.mrf.mxu0
      %v787 = vadd.f32 %v299, %v786
      %v788 = vpop.f32.mrf.mxu0
      %v789 = vpop.f32.mrf.mxu0
      %v790 = vadd.f32 %v299, %v789
      %v791 = vpop.f32.mrf.mxu0
      %792 = vmatprep.mubr.bf16.mxu0 0
      %793 = vmatmul.mubr.bf16.gmra.mxu0 %v543
      %v794 = vpop.f32.mrf.mxu0
      %v795 = vadd.f32 %v299, %v794
      %v796 = vpop.f32.mrf.mxu0
      %v797 = vpop.f32.mrf.mxu0
      %v798 = vadd.f32 %v299, %v797
      %v799 = vpop.f32.mrf.mxu0
      %800 = vmatprep.mubr.bf16.mxu0 0
      %801 = vmatmul.mubr.bf16.gmra.mxu0 %v546
      %v802 = vpop.f32.mrf.mxu0
      %v803 = vadd.f32 %v299, %v802
      %v804 = vpop.f32.mrf.mxu0
      %v805 = vpop.f32.mrf.mxu0
      %v806 = vadd.f32 %v299, %v805
      %v807 = vpop.f32.mrf.mxu0
      %808 = vmatprep.mubr.bf16.mxu0 0
      %809 = vmatmul.mubr.bf16.gmra.mxu0 %v549
      %v810 = vpop.f32.mrf.mxu0
      %v811 = vadd.f32 %v299, %v810
      %v812 = vpop.f32.mrf.mxu0
      %v813 = vpop.f32.mrf.mxu0
      %v814 = vadd.f32 %v299, %v813
      %v815 = vpop.f32.mrf.mxu0
      %816 = vmatprep.mubr.bf16.mxu0 0
      %817 = vmatmul.mubr.bf16.gmra.mxu0 %v552
      %v818 = vpop.f32.mrf.mxu0
      %v819 = vadd.f32 %v299, %v818
      %v820 = vpop.f32.mrf.mxu0
      %v821 = vpop.f32.mrf.mxu0
      %v822 = vadd.f32 %v299, %v821
      %v823 = vpop.f32.mrf.mxu0
      %824 = vmatprep.mubr.bf16.mxu0 0
      %825 = vmatmul.mubr.bf16.gmra.mxu0 %v555
      %v826 = vpop.f32.mrf.mxu0
      %v827 = vadd.f32 %v299, %v826
      %v828 = vpop.f32.mrf.mxu0
      %v829 = vpop.f32.mrf.mxu0
      %v830 = vadd.f32 %v299, %v829
      %v831 = vpop.f32.mrf.mxu0
      %832 = vmatprep.mubr.bf16.mxu0 0
      %833 = vmatmul.mubr.bf16.gmra.mxu0 %v558
      %v834 = vpop.f32.mrf.mxu0
      %v835 = vadd.f32 %v299, %v834
      %v836 = vpop.f32.mrf.mxu0
      %v837 = vpop.f32.mrf.mxu0
      %v838 = vadd.f32 %v299, %v837
      %v839 = vpop.f32.mrf.mxu0
      %840 = vmatprep.mubr.bf16.mxu0 0
      %841 = vmatmul.mubr.bf16.gmra.mxu0 %v561
      %v842 = vpop.f32.mrf.mxu0
      %v843 = vadd.f32 %v299, %v842
      %v844 = vpop.f32.mrf.mxu0
      %v845 = vpop.f32.mrf.mxu0
      %v846 = vadd.f32 %v299, %v845
      %v847 = vpop.f32.mrf.mxu0
      %848 = vmatprep.mubr.bf16.mxu0 0
      %849 = vmatmul.mubr.bf16.gmra.mxu0 %v564
      %v850 = vpop.f32.mrf.mxu0
      %v851 = vadd.f32 %v299, %v850
      %v852 = vpop.f32.mrf.mxu0
      %v853 = vpop.f32.mrf.mxu0
      %v854 = vadd.f32 %v299, %v853
      %v855 = vpop.f32.mrf.mxu0
      %856 = vmatprep.mubr.bf16.mxu0 0
      %857 = vmatmul.mubr.bf16.gmra.mxu0 %v567
      %v858 = vpop.f32.mrf.mxu0
      %v859 = vadd.f32 %v299, %v858
      %v860 = vpop.f32.mrf.mxu0
      %v861 = vpop.f32.mrf.mxu0
      %v862 = vadd.f32 %v299, %v861
      %v863 = vpop.f32.mrf.mxu0
      %864 = vdwg.mxu0
      %v865 = vmax.f32 %v611, 0.0
      %v866 = vmax.f32 %v614, 0.0
      %v867 = vmax.f32 %v619, 0.0
      %v868 = vmax.f32 %v622, 0.0
      %v869 = vmax.f32 %v627, 0.0
      %v870 = vmax.f32 %v630, 0.0
      %v871 = vmax.f32 %v635, 0.0
      %v872 = vmax.f32 %v638, 0.0
      %v873 = vmax.f32 %v643, 0.0
      %v874 = vmax.f32 %v646, 0.0
      %v875 = vmax.f32 %v651, 0.0
      %v876 = vmax.f32 %v654, 0.0
      %v877 = vmax.f32 %v659, 0.0
      %v878 = vmax.f32 %v662, 0.0
      %v879 = vmax.f32 %v667, 0.0
      %v880 = vmax.f32 %v670, 0.0
      %v881 = vmax.f32 %v675, 0.0
      %v882 = vmax.f32 %v678, 0.0
      %v883 = vmax.f32 %v683, 0.0
      %v884 = vmax.f32 %v686, 0.0
      %v885 = vmax.f32 %v691, 0.0
      %v886 = vmax.f32 %v694, 0.0
      %v887 = vmax.f32 %v699, 0.0
      %v888 = vmax.f32 %v702, 0.0
      %v889 = vmax.f32 %v707, 0.0
      %v890 = vmax.f32 %v710, 0.0
      %v891 = vmax.f32 %v715, 0.0
      %v892 = vmax.f32 %v718, 0.0
      %v893 = vmax.f32 %v723, 0.0
      %v894 = vmax.f32 %v726, 0.0
      %v895 = vmax.f32 %v731, 0.0
      %v896 = vmax.f32 %v734, 0.0
      %v897 = vmax.f32 %v739, 0.0
      %v898 = vmax.f32 %v742, 0.0
      %v899 = vmax.f32 %v747, 0.0
      %v900 = vmax.f32 %v750, 0.0
      %v901 = vmax.f32 %v755, 0.0
      %v902 = vmax.f32 %v758, 0.0
      %v903 = vmax.f32 %v763, 0.0
      %v904 = vmax.f32 %v766, 0.0
      %v905 = vmax.f32 %v771, 0.0
      %v906 = vmax.f32 %v774, 0.0
      %v907 = vmax.f32 %v779, 0.0
      %v908 = vmax.f32 %v782, 0.0
      %v909 = vmax.f32 %v787, 0.0
      %v910 = vmax.f32 %v790, 0.0
      %v911 = vmax.f32 %v795, 0.0
      %v912 = vmax.f32 %v798, 0.0
      %v913 = vmax.f32 %v803, 0.0
      %v914 = vmax.f32 %v806, 0.0
      %v915 = vmax.f32 %v811, 0.0
      %v916 = vmax.f32 %v814, 0.0
      %v917 = vmax.f32 %v819, 0.0
      %v918 = vmax.f32 %v822, 0.0
      %v919 = vmax.f32 %v827, 0.0
      %v920 = vmax.f32 %v830, 0.0
      %v921 = vmax.f32 %v835, 0.0
      %v922 = vmax.f32 %v838, 0.0
      %v923 = vmax.f32 %v843, 0.0
      %v924 = vmax.f32 %v846, 0.0
      %v925 = vmax.f32 %v851, 0.0
      %v926 = vmax.f32 %v854, 0.0
      %v927 = vmax.f32 %v859, 0.0
      %v928 = vmax.f32 %v862, 0.0
      %v929 = vpack.c.bf16 %v866, %v865
      %v930 = vpack.c.bf16 %v868, %v867
      %v931 = vpack.c.bf16 %v870, %v869
      %v932 = vpack.c.bf16 %v872, %v871
      %v933 = vpack.c.bf16 %v874, %v873
      %v934 = vpack.c.bf16 %v876, %v875
      %v935 = vpack.c.bf16 %v878, %v877
      %v936 = vpack.c.bf16 %v880, %v879
      %v937 = vpack.c.bf16 %v882, %v881
      %v938 = vpack.c.bf16 %v884, %v883
      %v939 = vpack.c.bf16 %v886, %v885
      %v940 = vpack.c.bf16 %v888, %v887
      %v941 = vpack.c.bf16 %v890, %v889
      %v942 = vpack.c.bf16 %v892, %v891
      %v943 = vpack.c.bf16 %v894, %v893
      %v944 = vpack.c.bf16 %v896, %v895
      %v945 = vpack.c.bf16 %v898, %v897
      %v946 = vpack.c.bf16 %v900, %v899
      %v947 = vpack.c.bf16 %v902, %v901
      %v948 = vpack.c.bf16 %v904, %v903
      %v949 = vpack.c.bf16 %v906, %v905
      %v950 = vpack.c.bf16 %v908, %v907
      %v951 = vpack.c.bf16 %v910, %v909
      %v952 = vpack.c.bf16 %v912, %v911
      %v953 = vpack.c.bf16 %v914, %v913
      %v954 = vpack.c.bf16 %v916, %v915
      %v955 = vpack.c.bf16 %v918, %v917
      %v956 = vpack.c.bf16 %v920, %v919
      %v957 = vpack.c.bf16 %v922, %v921
      %v958 = vpack.c.bf16 %v924, %v923
      %v959 = vpack.c.bf16 %v926, %v925
      %v960 = vpack.c.bf16 %v928, %v927
      %v993 = vunpack.c.l.b16 %v929
      %v994 = vunpack.c.h.b16 %v929
      %v995 = vunpack.c.l.b16 %v930
      %v996 = vunpack.c.h.b16 %v930
      %v997 = vunpack.c.l.b16 %v931
      %v998 = vunpack.c.h.b16 %v931
      %v999 = vunpack.c.l.b16 %v932
      %v1000 = vunpack.c.h.b16 %v932
      %v1001 = vunpack.c.l.b16 %v933
      %v1002 = vunpack.c.h.b16 %v933
      %v1003 = vunpack.c.l.b16 %v934
      %v1004 = vunpack.c.h.b16 %v934
      %v1005 = vunpack.c.l.b16 %v935
      %v1006 = vunpack.c.h.b16 %v935
      %v1007 = vunpack.c.l.b16 %v936
      %v1008 = vunpack.c.h.b16 %v936
      %v1009 = vunpack.c.l.b16 %v937
      %v1010 = vunpack.c.h.b16 %v937
      %v1011 = vunpack.c.l.b16 %v938
      %v1012 = vunpack.c.h.b16 %v938
      %v1013 = vunpack.c.l.b16 %v939
      %v1014 = vunpack.c.h.b16 %v939
      %v1015 = vunpack.c.l.b16 %v940
      %v1016 = vunpack.c.h.b16 %v940
      %v1017 = vunpack.c.l.b16 %v941
      %v1018 = vunpack.c.h.b16 %v941
      %v1019 = vunpack.c.l.b16 %v942
      %v1020 = vunpack.c.h.b16 %v942
      %v1021 = vunpack.c.l.b16 %v943
      %v1022 = vunpack.c.h.b16 %v943
      %v1023 = vunpack.c.l.b16 %v944
      %v1024 = vunpack.c.h.b16 %v944
      %v1025 = vunpack.c.l.b16 %v945
      %v1026 = vunpack.c.h.b16 %v945
      %v1027 = vunpack.c.l.b16 %v946
      %v1028 = vunpack.c.h.b16 %v946
      %v1029 = vunpack.c.l.b16 %v947
      %v1030 = vunpack.c.h.b16 %v947
      %v1031 = vunpack.c.l.b16 %v948
      %v1032 = vunpack.c.h.b16 %v948
      %v1033 = vunpack.c.l.b16 %v949
      %v1034 = vunpack.c.h.b16 %v949
      %v1035 = vunpack.c.l.b16 %v950
      %v1036 = vunpack.c.h.b16 %v950
      %v1037 = vunpack.c.l.b16 %v951
      %v1038 = vunpack.c.h.b16 %v951
      %v1039 = vunpack.c.l.b16 %v952
      %v1040 = vunpack.c.h.b16 %v952
      %v1041 = vunpack.c.l.b16 %v953
      %v1042 = vunpack.c.h.b16 %v953
      %v1043 = vunpack.c.l.b16 %v954
      %v1044 = vunpack.c.h.b16 %v954
      %v1045 = vunpack.c.l.b16 %v955
      %v1046 = vunpack.c.h.b16 %v955
      %v1047 = vunpack.c.l.b16 %v956
      %v1048 = vunpack.c.h.b16 %v956
      %v1049 = vunpack.c.l.b16 %v957
      %v1050 = vunpack.c.h.b16 %v957
      %v1051 = vunpack.c.l.b16 %v958
      %v1052 = vunpack.c.h.b16 %v958
      %v1053 = vunpack.c.l.b16 %v959
      %v1054 = vunpack.c.h.b16 %v959
      %v1055 = vunpack.c.l.b16 %v960
      %v1056 = vunpack.c.h.b16 %v960
      %v1057 = vpack.c.b16 %v993, %v993
      %v1058 = vpack.c.b16 %v994, %v994
      %v1059 = vpack.c.b16 %v995, %v995
      %v1060 = vpack.c.b16 %v996, %v996
      %v1061 = vpack.c.b16 %v997, %v997
      %v1062 = vpack.c.b16 %v998, %v998
      %v1063 = vpack.c.b16 %v999, %v999
      %v1064 = vpack.c.b16 %v1000, %v1000
      %v1065 = vpack.c.b16 %v1001, %v1001
      %v1066 = vpack.c.b16 %v1002, %v1002
      %v1067 = vpack.c.b16 %v1003, %v1003
      %v1068 = vpack.c.b16 %v1004, %v1004
      %v1069 = vpack.c.b16 %v1005, %v1005
      %v1070 = vpack.c.b16 %v1006, %v1006
      %v1071 = vpack.c.b16 %v1007, %v1007
      %v1072 = vpack.c.b16 %v1008, %v1008
      %v1073 = vpack.c.b16 %v1009, %v1009
      %v1074 = vpack.c.b16 %v1010, %v1010
      %v1075 = vpack.c.b16 %v1011, %v1011
      %v1076 = vpack.c.b16 %v1012, %v1012
      %v1077 = vpack.c.b16 %v1013, %v1013
      %v1078 = vpack.c.b16 %v1014, %v1014
      %v1079 = vpack.c.b16 %v1015, %v1015
      %v1080 = vpack.c.b16 %v1016, %v1016
      %v1081 = vpack.c.b16 %v1017, %v1017
      %v1082 = vpack.c.b16 %v1018, %v1018
      %v1083 = vpack.c.b16 %v1019, %v1019
      %v1084 = vpack.c.b16 %v1020, %v1020
      %v1085 = vpack.c.b16 %v1021, %v1021
      %v1086 = vpack.c.b16 %v1022, %v1022
      %v1087 = vpack.c.b16 %v1023, %v1023
      %v1088 = vpack.c.b16 %v1024, %v1024
      %v1089 = vpack.c.b16 %v1025, %v1025
      %v1090 = vpack.c.b16 %v1026, %v1026
      %v1091 = vpack.c.b16 %v1027, %v1027
      %v1092 = vpack.c.b16 %v1028, %v1028
      %v1093 = vpack.c.b16 %v1029, %v1029
      %v1094 = vpack.c.b16 %v1030, %v1030
      %v1095 = vpack.c.b16 %v1031, %v1031
      %v1096 = vpack.c.b16 %v1032, %v1032
      %v1097 = vpack.c.b16 %v1033, %v1033
      %v1098 = vpack.c.b16 %v1034, %v1034
      %v1099 = vpack.c.b16 %v1035, %v1035
      %v1100 = vpack.c.b16 %v1036, %v1036
      %v1101 = vpack.c.b16 %v1037, %v1037
      %v1102 = vpack.c.b16 %v1038, %v1038
      %v1103 = vpack.c.b16 %v1039, %v1039
      %v1104 = vpack.c.b16 %v1040, %v1040
      %v1105 = vpack.c.b16 %v1041, %v1041
      %v1106 = vpack.c.b16 %v1042, %v1042
      %v1107 = vpack.c.b16 %v1043, %v1043
      %v1108 = vpack.c.b16 %v1044, %v1044
      %v1109 = vpack.c.b16 %v1045, %v1045
      %v1110 = vpack.c.b16 %v1046, %v1046
      %v1111 = vpack.c.b16 %v1047, %v1047
      %v1112 = vpack.c.b16 %v1048, %v1048
      %v1113 = vpack.c.b16 %v1049, %v1049
      %v1114 = vpack.c.b16 %v1050, %v1050
      %v1115 = vpack.c.b16 %v1051, %v1051
      %v1116 = vpack.c.b16 %v1052, %v1052
      %v1117 = vpack.c.b16 %v1053, %v1053
      %v1118 = vpack.c.b16 %v1054, %v1054
      %v1119 = vpack.c.b16 %v1055, %v1055
      %v1120 = vpack.c.b16 %v1056, %v1056
      %1185 = vst [vmem:[%s223] sm:$0xf] %v1057
      %1186 = vst [vmem:[%s223 + $0x4] sm:$0xf] %v1058
      %1187 = vst [vmem:[%s223 + $0x8] sm:$0xf] %v1059
      %1188 = vst [vmem:[%s223 + $0xc] sm:$0xf] %v1060
      %1189 = vst [vmem:[%s223 + $0x10] sm:$0xf] %v1061
      %1190 = vst [vmem:[%s223 + $0x14] sm:$0xf] %v1062
      %1191 = vst [vmem:[%s223 + $0x18] sm:$0xf] %v1063
      %1192 = vst [vmem:[%s223 + $0x1c] sm:$0xf] %v1064
      %1193 = vst [vmem:[%s223 + $0x20] sm:$0xf] %v1065
      %1194 = vst [vmem:[%s223 + $0x24] sm:$0xf] %v1066
      %1195 = vst [vmem:[%s223 + $0x28] sm:$0xf] %v1067
      %1196 = vst [vmem:[%s223 + $0x2c] sm:$0xf] %v1068
      %1197 = vst [vmem:[%s223 + $0x30] sm:$0xf] %v1069
      %1198 = vst [vmem:[%s223 + $0x34] sm:$0xf] %v1070
      %1199 = vst [vmem:[%s223 + $0x38] sm:$0xf] %v1071
      %1200 = vst [vmem:[%s223 + $0x3c] sm:$0xf] %v1072
      %1201 = vst [vmem:[%s223 + $0x40] sm:$0xf] %v1073
      %1202 = vst [vmem:[%s223 + $0x44] sm:$0xf] %v1074
      %1203 = vst [vmem:[%s223 + $0x48] sm:$0xf] %v1075
      %1204 = vst [vmem:[%s223 + $0x4c] sm:$0xf] %v1076
      %1205 = vst [vmem:[%s223 + $0x50] sm:$0xf] %v1077
      %1206 = vst [vmem:[%s223 + $0x54] sm:$0xf] %v1078
      %1207 = vst [vmem:[%s223 + $0x58] sm:$0xf] %v1079
      %1208 = vst [vmem:[%s223 + $0x5c] sm:$0xf] %v1080
      %1209 = vst [vmem:[%s223 + $0x60] sm:$0xf] %v1081
      %1210 = vst [vmem:[%s223 + $0x64] sm:$0xf] %v1082
      %1211 = vst [vmem:[%s223 + $0x68] sm:$0xf] %v1083
      %1212 = vst [vmem:[%s223 + $0x6c] sm:$0xf] %v1084
      %1213 = vst [vmem:[%s223 + $0x70] sm:$0xf] %v1085
      %1214 = vst [vmem:[%s223 + $0x74] sm:$0xf] %v1086
      %1215 = vst [vmem:[%s223 + $0x78] sm:$0xf] %v1087
      %1216 = vst [vmem:[%s223 + $0x7c] sm:$0xf] %v1088
      %1217 = vst [vmem:[%s223 + $0x80] sm:$0xf] %v1089
      %1218 = vst [vmem:[%s223 + $0x84] sm:$0xf] %v1090
      %1219 = vst [vmem:[%s223 + $0x88] sm:$0xf] %v1091
      %1220 = vst [vmem:[%s223 + $0x8c] sm:$0xf] %v1092
      %1221 = vst [vmem:[%s223 + $0x90] sm:$0xf] %v1093
      %1222 = vst [vmem:[%s223 + $0x94] sm:$0xf] %v1094
      %1223 = vst [vmem:[%s223 + $0x98] sm:$0xf] %v1095
      %1224 = vst [vmem:[%s223 + $0x9c] sm:$0xf] %v1096
      %1225 = vst [vmem:[%s223 + $0xa0] sm:$0xf] %v1097
      %1226 = vst [vmem:[%s223 + $0xa4] sm:$0xf] %v1098
      %1227 = vst [vmem:[%s223 + $0xa8] sm:$0xf] %v1099
      %1228 = vst [vmem:[%s223 + $0xac] sm:$0xf] %v1100
      %1229 = vst [vmem:[%s223 + $0xb0] sm:$0xf] %v1101
      %1230 = vst [vmem:[%s223 + $0xb4] sm:$0xf] %v1102
      %1231 = vst [vmem:[%s223 + $0xb8] sm:$0xf] %v1103
      %1232 = vst [vmem:[%s223 + $0xbc] sm:$0xf] %v1104
      %1233 = vst [vmem:[%s223 + $0xc0] sm:$0xf] %v1105
      %1234 = vst [vmem:[%s223 + $0xc4] sm:$0xf] %v1106
      %1235 = vst [vmem:[%s223 + $0xc8] sm:$0xf] %v1107
      %1236 = vst [vmem:[%s223 + $0xcc] sm:$0xf] %v1108
      %1237 = vst [vmem:[%s223 + $0xd0] sm:$0xf] %v1109
      %1238 = vst [vmem:[%s223 + $0xd4] sm:$0xf] %v1110
      %1239 = vst [vmem:[%s223 + $0xd8] sm:$0xf] %v1111
      %1240 = vst [vmem:[%s223 + $0xdc] sm:$0xf] %v1112
      %1241 = vst [vmem:[%s223 + $0xe0] sm:$0xf] %v1113
      %1242 = vst [vmem:[%s223 + $0xe4] sm:$0xf] %v1114
      %1243 = vst [vmem:[%s223 + $0xe8] sm:$0xf] %v1115
      %1244 = vst [vmem:[%s223 + $0xec] sm:$0xf] %v1116
      %1245 = vst [vmem:[%s223 + $0xf0] sm:$0xf] %v1117
      %1246 = vst [vmem:[%s223 + $0xf4] sm:$0xf] %v1118
      %1247 = vst [vmem:[%s223 + $0xf8] sm:$0xf] %v1119
      %1248 = vst [vmem:[%s223 + $0xfc] sm:$0xf] %v1120
      %s1249 = smul.u32 64, %s18
      %p1250 = scmp.lt.s32.totalorder %s1249, 3711
      %s1251 = scalar_select %p1250, %s1249, 3711
      %p1252 = scmp.lt.s32.totalorder %s19, 0
      %s1253 = scalar_select %p1252, %s19, 0
      %s1254 = sadd.s32 %s1253, %s1251
      %s1255 = smul.addr %s1254, 4
      %s1256 = scalar_lea.vmem %s3, %s1255
      // Predicated region
      $region33: #{matmul_bias.1} parent=31 // pred_check
        %p1257 = pneg %p124
      $region34: #{matmul_bias.1} parent=31 // pred_check_branch
        %1259 = sbr.rel (%p1257) target = $region36
      $region35: #{matmul_bias.1} parent=31 // pred_region
        %s1260 = smul.u32 64, %s18
      $region36: #{matmul_bias.1} parent=31 // pred_fallthru
        _
    $region32: #{matmul_bias.1} parent=5 // pred_fallthru
      _
    %p1261 = scmp.le.s32.totalorder 2, %s9
    // Predicated region
    $region37: #{matmul_bias.1} parent=5 // pred_check
      %p1262 = pneg %p1261
    $region38: #{matmul_bias.1} parent=5 // pred_check_branch
      %1264 = sbr.rel (%p1262) target = $region40
    $region39: #{matmul_bias.1} parent=5 // pred_region
      %s1265 = ssub.s32 %s9, 2
      // Predicated region
      $region41: #{matmul_bias.1} parent=39 // pred_check
        %p1266 = pneg %p130
      $region42: #{matmul_bias.1} parent=39 // pred_check_branch
        %1268 = sbr.rel (%p1266) target = $region44
      $region43: #{matmul_bias.1} parent=39 // pred_region
        %s1269 = smul.u32 64, %s20
        %p1270 = scmp.lt.s32.totalorder %s1269, 3711
        %s1271 = scalar_select %p1270, %s1269, 3711
        %p1272 = scmp.lt.s32.totalorder %s21, 0
        %s1273 = scalar_select %p1272, %s21, 0
        %s1274 = sadd.s32 %s1273, %s1271
        %s1275 = smul.addr %s1274, 4
        %s1276 = scalar_lea.vmem %s3, %s1275
      $region44: #{matmul_bias.1} parent=39 // pred_fallthru
        _
    $region40: #{matmul_bias.1} parent=5 // pred_fallthru
      _
  $region6: #{matmul_bias.1} parent=0 // loop_footer
    %s13 = sadd.s32 1, %s9
  $region7: #{matmul_bias.1} parent=0 // loop_footer_branch
    %8 = sbr.rel target = $region3
  $region8: #{matmul_bias.1} parent=0 // loop_exit
    _

</llo_original>
